<compile_context>
chip_gen: v5e
topology: v5e:2x2
jax: 0.10.0
libtpu: 0.0.40
codegen_flags: <defaults>
</compile_context>

<pallas_src>
import functools
import math

import jax
import jax.numpy as jnp
from jax.experimental import pallas as pl
from jax.experimental.pallas import tpu as pltpu


# ----------------------------------------------------------------------------
# Helpers
# ----------------------------------------------------------------------------
def _round_up(x, m):
    return ((x + m - 1) // m) * m


def _pad2(a, rows, cols):
    """Zero-pad a 2-D array up to (rows, cols)."""
    pr, pc = rows - a.shape[0], cols - a.shape[1]
    if pr or pc:
        a = jnp.pad(a, ((0, pr), (0, pc)))
    return a


@functools.lru_cache(maxsize=1)
def _vmem_caps():
    """(tile-sizing budget, vmem_limit_bytes) derived from the chip's VMEM.

    Queried lazily (first MLP construction), not at import time.  Under
    AOT/cross-compilation this reflects the visible backend; the fallback is a
    conservative 64 MiB (v7x per-TC VMEM).
    """
    try:
        cap = int(pltpu.get_tpu_info().vmem_capacity_bytes)
    except Exception:
        cap = 64 * 1024 * 1024
    budget = int(cap * 0.70)   # what tile / residency sizing is checked against
    limit = int(cap * 0.80)    # scoped VMEM limit requested from Mosaic
    return budget, limit


def _largest_div_tile(dim_pad, pref):
    """Largest multiple of 128 that divides dim_pad (itself a multiple of 128)
    and is <= pref.  Used for K/N tiles so no ragged (garbage) reduction blocks."""
    q = dim_pad // 128
    best = 1
    for d in range(1, q + 1):
        if q % d == 0 and 128 * d <= pref:
            best = d
    return 128 * best


# ----------------------------------------------------------------------------
# Fused whole-/sub-stack kernel (weights resident in VMEM, grid over row tiles)
# ----------------------------------------------------------------------------
def _fused_mlp_kernel(x_ref, *refs, acts):
    """refs = (w0, b0, w1, b1, ..., o_ref). Chains dot -> act entirely in VMEM."""
    o_ref = refs[-1]
    h = x_ref[...]
    for l, act in enumerate(acts):
        w = refs[2 * l][...]
        b = refs[2 * l + 1][...]
        # MXU matmul with f32 accumulation; bias added once per tile in f32.
        y = jnp.dot(h, w, preferred_element_type=jnp.float32) + b.astype(jnp.float32)
        if act == "relu":
            # Cast back to the param dtype so the next dot runs at the bf16 MXU
            # rate when params are bf16 (no-op for f32).
            h = jnp.maximum(y, 0.0).astype(w.dtype)
        else:  # "sigmoid" -- keep exp/recip math in f32 (no bf16 EUP on v5e)
            h = jax.nn.sigmoid(y)
    o_ref[...] = h.astype(o_ref.dtype)


def _fit_row_tile(n_rows, dims_pad, act_itemsize, param_itemsize, budget):
    """Largest row tile whose fused working set fits the VMEM budget.

    Weights/biases are single-buffered (constant index_map -> pl.Buffered(1)),
    so they are counted exactly once, in the PARAMETER dtype."""
    wbytes = 0
    for din, dout in zip(dims_pad[:-1], dims_pad[1:]):
        wbytes += (din * dout + dout) * param_itemsize
    row_cap = _round_up(max(n_rows, 1), 8)
    per_row = 2 * dims_pad[0] * act_itemsize        # x tile (double-buffered)
    per_row += 2 * dims_pad[-1] * act_itemsize      # out tile (double-buffered)
    per_row += sum(d * 4 for d in dims_pad[1:])     # f32 intermediates
    for tm in (512, 256, 128, 64, 32, 16, 8):
        if tm > row_cap:
            continue
        # Guarantee >= 2 grid steps whenever there is enough work, so v7x's
        # two TensorCores both get row tiles (and the x-tile DMA can overlap).
        if row_cap >= 16 and tm >= row_cap:
            continue
        if wbytes + tm * per_row <= budget:
            return tm
    return None


def _fused_stack(x_p, flat_params, dims_pad, acts, tm, vmem_limit):
    """One pallas_call over a (sub-)stack of layers whose weights are VMEM-resident.

    x_p: (n_pad, dims_pad[0]) with n_pad a multiple of 8 (rows NOT padded to tm;
    the ragged last row tile is masked by Pallas)."""
    n_pad = x_p.shape[0]
    row_map = lambda i: (i, 0)
    const_map = lambda i: (0, 0)

    in_specs = [pl.BlockSpec((tm, dims_pad[0]), row_map)]
    for l in range(len(acts)):
        # Grid-invariant blocks: single-buffer them (no point double-buffering).
        in_specs.append(pl.BlockSpec((dims_pad[l], dims_pad[l + 1]), const_map,
                                     pipeline_mode=pl.Buffered(1)))
        in_specs.append(pl.BlockSpec((1, dims_pad[l + 1]), const_map,
                                     pipeline_mode=pl.Buffered(1)))

    kernel = functools.partial(_fused_mlp_kernel, acts=tuple(acts))
    out = pl.pallas_call(
        kernel,
        out_shape=jax.ShapeDtypeStruct((n_pad, dims_pad[-1]), x_p.dtype),
        grid_spec=pltpu.PrefetchScalarGridSpec(
            num_scalar_prefetch=0,
            grid=(pl.cdiv(n_pad, tm),),
            in_specs=in_specs,
            out_specs=pl.BlockSpec((tm, dims_pad[-1]), row_map),
        ),
        compiler_params=pltpu.CompilerParams(
            dimension_semantics=("parallel",),
            vmem_limit_bytes=vmem_limit,
        ),
    )(x_p, *flat_params)
    return out


# ----------------------------------------------------------------------------
# Fallback: per-layer M/N/K-tiled Linear + activation with f32 accumulator
# ----------------------------------------------------------------------------
def _linear_tiled_kernel(x_ref, w_ref, b_ref, o_ref, acc_ref, *, act):
    k = pl.program_id(2)

    @pl.when(k == 0)
    def _():
        # Fold the bias add into the accumulator init (once per (i, j) tile).
        acc_ref[...] = jnp.broadcast_to(
            b_ref[...].astype(jnp.float32), acc_ref.shape
        )

    acc_ref[...] += jnp.dot(
        x_ref[...], w_ref[...], preferred_element_type=jnp.float32
    )

    @pl.when(k == pl.num_programs(2) - 1)
    def _():
        y = acc_ref[...]
        if act == "relu":
            y = jnp.maximum(y, 0.0)
        elif act == "sigmoid":
            y = jax.nn.sigmoid(y)
        o_ref[...] = y.astype(o_ref.dtype)


def _tiled_layer(x_p, w_p, b_p, act, budget, vmem_limit,
                 tm_pref=512, tn_pref=512, tk_pref=1024):
    """act(x_p @ w_p + b_p) for a layer too big for VMEM residency.

    All feature dims are pre-padded to multiples of 128; K/N tiles are chosen
    as divisors of the padded dims so the reduction axis never sees a ragged
    (out-of-bounds) block.  Row tiles use a cdiv grid (masked last tile)."""
    n_pad, k_pad = x_p.shape
    _, m_pad = w_p.shape
    act_isz = jnp.dtype(x_p.dtype).itemsize
    par_isz = jnp.dtype(w_p.dtype).itemsize

    tk = _largest_div_tile(k_pad, tk_pref)
    tn = _largest_div_tile(m_pad, tn_pref)

    tm = 8
    for cand in (512, 256, 128, 64, 32, 16, 8):
        if cand > max(_round_up(n_pad, 8), 8) or cand > tm_pref:
            continue
        need = (2 * cand * tk * act_isz      # x tile (double-buffered)
                + 2 * tk * tn * par_isz      # w tile
                + 2 * tn * par_isz           # b tile
                + 2 * cand * tn * act_isz    # out tile
                + cand * tn * 4)             # f32 accumulator scratch
        if need <= budget:
            tm = cand
            break

    kernel = functools.partial(_linear_tiled_kernel, act=act)
    out = pl.pallas_call(
        kernel,
        out_shape=jax.ShapeDtypeStruct((n_pad, m_pad), x_p.dtype),
        grid_spec=pltpu.PrefetchScalarGridSpec(
            num_scalar_prefetch=0,
            grid=(pl.cdiv(n_pad, tm), m_pad // tn, k_pad // tk),  # K last
            in_specs=[
                pl.BlockSpec((tm, tk), lambda i, j, k: (i, k)),
                pl.BlockSpec((tk, tn), lambda i, j, k: (k, j)),
                pl.BlockSpec((1, tn), lambda i, j, k: (0, j)),
            ],
            out_specs=pl.BlockSpec((tm, tn), lambda i, j, k: (i, j)),
            scratch_shapes=[pltpu.VMEM((tm, tn), jnp.float32)],
        ),
        compiler_params=pltpu.CompilerParams(
            dimension_semantics=("parallel", "parallel", "arbitrary"),
            vmem_limit_bytes=vmem_limit,
        ),
    )(x_p, w_p, b_p)
    return out


def linear_tiled(x, w, b, act):
    """Standalone act(x @ w + b) via the M/N/K-tiled kernel (for testing)."""
    budget, limit = _vmem_caps()
    n, kdim = x.shape
    _, m = w.shape
    k_pad, m_pad = _round_up(kdim, 128), _round_up(m, 128)
    n_pad = _round_up(n, 8)
    x_p = _pad2(x, n_pad, k_pad)
    w_p = _pad2(w, k_pad, m_pad)
    b_p = _pad2(b.reshape(1, -1), 1, m_pad)
    out = _tiled_layer(x_p, w_p, b_p, act, budget, limit)
    return out[:n, :m]


# ----------------------------------------------------------------------------
# Whole-forward (jitted): greedy fusion of VMEM-resident sub-stacks
# ----------------------------------------------------------------------------
def _mlp_forward(x, flat_params, *, dims, dims_pad, acts, budget, vmem_limit):
    n_layers = len(acts)
    n = x.shape[0]
    act_isz = jnp.dtype(x.dtype).itemsize
    par_isz = jnp.dtype(flat_params[0].dtype).itemsize

    # Rows are padded only to a multiple of 8 (ragged last row tile is masked);
    # input features are padded once to the lane-dense width of the weights.
    n_pad = _round_up(n, 8)
    h = _pad2(x, n_pad, dims_pad[0])

    l = 0
    while l < n_layers:
        # Longest contiguous sub-stack starting at l whose (single-buffered)
        # weights + a row tile fit the VMEM budget -> one fused pallas_call.
        best = None
        r = l + 1
        while r <= n_layers:
            tm = _fit_row_tile(n_pad, dims_pad[l:r + 1], act_isz, par_isz, budget)
            if tm is None:
                break
            best = (r, tm)
            r += 1
        if best is not None:
            r, tm = best
            h = _fused_stack(h, flat_params[2 * l:2 * r], dims_pad[l:r + 1],
                             acts[l:r], tm, vmem_limit)
            l = r
        else:
            # Layer too large for VMEM residency: M/N/K-tiled matmul.
            h = _tiled_layer(h, flat_params[2 * l], flat_params[2 * l + 1],
                             acts[l], budget, vmem_limit)
            l += 1

    return h[:n, :dims[-1]]


# ----------------------------------------------------------------------------
# Module mirror
# ----------------------------------------------------------------------------
class MLPPallas:
    """Mirror of the PyTorch MLP forward (inference mode: dropout is a no-op).

    Default dtype is bf16 (f32 MXU accumulation + f32 sigmoid inside the
    kernels) to hit the bf16 MXU rate and halve HBM/VMEM traffic; pass
    dtype=jnp.float32 for bit-tight numerics vs. an f32 reference.
    """

    def __init__(self, in_channels, hidden_channels, out_channels,
                 num_layers=1, dropout=0.0, key=None, dtype=jnp.bfloat16):
        if key is None:
            key = jax.random.PRNGKey(0)
        if num_layers == 1:
            shapes = [(in_channels, out_channels)]
        else:
            shapes = [(in_channels, hidden_channels)]
            shapes += [(hidden_channels, hidden_channels)] * (num_layers - 2)
            shapes += [(hidden_channels, out_channels)]

        self.params = []
        for (fan_in, fan_out) in shapes:
            key, kw, kb = jax.random.split(key, 3)
            # PyTorch nn.Linear default init: U(-1/sqrt(fan_in), 1/sqrt(fan_in)).
            # Weights stored pre-transposed as (in_f, out_f) for y = x @ W + b.
            bound = 1.0 / math.sqrt(fan_in)
            w = jax.random.uniform(kw, (fan_in, fan_out), jnp.float32, -bound, bound)
            b = jax.random.uniform(kb, (fan_out,), jnp.float32, -bound, bound)
            self.params.append((w.astype(dtype), b.astype(dtype)))

        self.dropout = dropout
        self.dtype = dtype

        dims = [in_channels] + [fo for (_, fo) in shapes]
        dims_pad = [_round_up(d, 128) for d in dims]          # lane-dense features
        acts = ["relu"] * (len(self.params) - 1) + ["sigmoid"]

        # Pre-pad weights/biases ONCE (not per forward call).
        flat = []
        for l, (w, b) in enumerate(self.params):
            flat.append(_pad2(w, dims_pad[l], dims_pad[l + 1]))
            flat.append(_pad2(b.reshape(1, -1), 1, dims_pad[l + 1]))
        self._flat_params = tuple(flat)

        budget, limit = _vmem_caps()
        self._fwd = jax.jit(functools.partial(
            _mlp_forward,
            dims=tuple(dims),
            dims_pad=tuple(dims_pad),
            acts=tuple(acts),
            budget=budget,
            vmem_limit=limit,
        ))
        # TODO(synk): optional fp8 weight storage for v7x (halves resident VMEM
        # again vs bf16) is not implemented.

    def __call__(self, x):
        return self._fwd(x.astype(self.dtype), self._flat_params)


# ----------------------------------------------------------------------------
# Demo / correctness check
# ----------------------------------------------------------------------------
if __name__ == "__main__":
    key = jax.random.PRNGKey(0)
    kx, kp = jax.random.split(key)

    N, IN_C, HID_C, OUT_C = 8, 16, 32, 8
    x = jax.random.normal(kx, (N, IN_C), jnp.float32)

    # f32 instance: tight check against a plain-JAX reference (same math as
    # the PyTorch forward in eval mode).
    mlp_f32 = MLPPallas(IN_C, HID_C, OUT_C, num_layers=2, dropout=0.0,
                        key=kp, dtype=jnp.float32)
    out = jax.block_until_ready(mlp_f32(x))
    ref = x
    for (w, b) in mlp_f32.params[:-1]:
        ref = jnp.maximum(ref @ w + b, 0.0)
    w_last, b_last = mlp_f32.params[-1]
    ref = jax.nn.sigmoid(ref @ w_last + b_last)
    assert out.shape == (N, OUT_C)
    assert jnp.allclose(out, ref, atol=1e-5, rtol=1e-5)

    # Exercise the M/N/K-tiled fallback kernel (used for VMEM-oversized layers).
    w0, b0 = mlp_f32.params[0]
    y_tiled = jax.block_until_ready(linear_tiled(x, w0, b0, "relu"))
    assert jnp.allclose(y_tiled, jnp.maximum(x @ w0 + b0, 0.0), atol=1e-5, rtol=1e-5)

    # Default (bf16) instance: f32 accumulation + f32 sigmoid inside the kernel,
    # bf16 params/activations -> check against an f32 reference with bf16 tolerance.
    mlp_bf16 = MLPPallas(IN_C, HID_C, OUT_C, num_layers=3, dropout=0.0, key=kp)
    out_bf = jax.block_until_ready(mlp_bf16(x))
    ref_bf = x
    for (w, b) in mlp_bf16.params[:-1]:
        ref_bf = jnp.maximum(ref_bf @ w.astype(jnp.float32) + b.astype(jnp.float32), 0.0)
    w_last, b_last = mlp_bf16.params[-1]
    ref_bf = jax.nn.sigmoid(ref_bf @ w_last.astype(jnp.float32) + b_last.astype(jnp.float32))
    assert out_bf.shape == (N, OUT_C)
    assert jnp.allclose(out_bf.astype(jnp.float32), ref_bf, atol=3e-2, rtol=3e-2)

    print("KERNEL_OK")
</pallas_src>

<mosaic_0001>
module attributes {stable_mosaic.version = 11 : i64} {
  func.func @_fused_mlp_kernel(%arg0: i32, %arg1: memref<8x128xf32, #tpu.memory_space<vmem>>, %arg2: memref<128x128xf32, #tpu.memory_space<vmem>>, %arg3: memref<1x128xf32, #tpu.memory_space<vmem>>, %arg4: memref<128x128xf32, #tpu.memory_space<vmem>>, %arg5: memref<1x128xf32, #tpu.memory_space<vmem>>, %arg6: memref<8x128xf32, #tpu.memory_space<vmem>>) attributes {dimension_semantics = [#tpu.dimension_semantics<parallel>], iteration_bounds = array<i64: 1>, scalar_prefetch = 0 : i64, scratch_operands = 0 : i64, tpu.core_type = #tpu.core_type<tc>, window_params = [{transform_indices = @transform_0, window_bounds = array<i64: 8, 128>}, {pipeline_mode = #tpu.pipeline_mode<synchronous>, transform_indices = @transform_1, window_bounds = array<i64: 128, 128>}, {pipeline_mode = #tpu.pipeline_mode<synchronous>, transform_indices = @transform_2, window_bounds = array<i64: 1, 128>}, {pipeline_mode = #tpu.pipeline_mode<synchronous>, transform_indices = @transform_3, window_bounds = array<i64: 128, 128>}, {pipeline_mode = #tpu.pipeline_mode<synchronous>, transform_indices = @transform_4, window_bounds = array<i64: 1, 128>}, {transform_indices = @transform_5, window_bounds = array<i64: 8, 128>}]} {
    %c0 = arith.constant 0 : index
    %c0_0 = arith.constant 0 : index
    %0 = vector.load %arg1[%c0, %c0_0] : memref<8x128xf32, #tpu.memory_space<vmem>>, vector<8x128xf32>
    %c0_1 = arith.constant 0 : index
    %c0_2 = arith.constant 0 : index
    %1 = vector.load %arg2[%c0_1, %c0_2] : memref<128x128xf32, #tpu.memory_space<vmem>>, vector<128x128xf32>
    %c0_3 = arith.constant 0 : index
    %c0_4 = arith.constant 0 : index
    %2 = vector.load %arg3[%c0_3, %c0_4] : memref<1x128xf32, #tpu.memory_space<vmem>>, vector<1x128xf32>
    %cst = arith.constant dense<0.000000e+00> : vector<8x128xf32>
    %3 = tpu.matmul %0, %1, %cst {dimension_numbers = #tpu.dot_dimension_numbers<[1], [0], [0], [1], [0, 0, 1, 1], [], []>} : vector<8x128xf32>, vector<128x128xf32>, vector<8x128xf32> -> vector<8x128xf32>
    %4 = vector.broadcast %2 : vector<1x128xf32> to vector<8x128xf32>
    %5 = arith.addf %3, %4 : vector<8x128xf32>
    %cst_5 = arith.constant 0.000000e+00 : f32
    %6 = vector.broadcast %cst_5 : f32 to vector<8x128xf32>
    %7 = arith.maximumf %5, %6 : vector<8x128xf32>
    %c0_6 = arith.constant 0 : index
    %c0_7 = arith.constant 0 : index
    %8 = vector.load %arg4[%c0_6, %c0_7] : memref<128x128xf32, #tpu.memory_space<vmem>>, vector<128x128xf32>
    %c0_8 = arith.constant 0 : index
    %c0_9 = arith.constant 0 : index
    %9 = vector.load %arg5[%c0_8, %c0_9] : memref<1x128xf32, #tpu.memory_space<vmem>>, vector<1x128xf32>
    %cst_10 = arith.constant dense<0.000000e+00> : vector<8x128xf32>
    %10 = tpu.matmul %7, %8, %cst_10 {dimension_numbers = #tpu.dot_dimension_numbers<[1], [0], [0], [1], [0, 0, 1, 1], [], []>} : vector<8x128xf32>, vector<128x128xf32>, vector<8x128xf32> -> vector<8x128xf32>
    %11 = vector.broadcast %9 : vector<1x128xf32> to vector<8x128xf32>
    %12 = arith.addf %10, %11 : vector<8x128xf32>
    %13 = arith.negf %12 : vector<8x128xf32>
    %14 = math.exp %13 : vector<8x128xf32>
    %cst_11 = arith.constant 1.000000e+00 : f32
    %15 = vector.broadcast %cst_11 : f32 to vector<8x128xf32>
    %16 = arith.addf %15, %14 : vector<8x128xf32>
    %17 = arith.divf %15, %16 : vector<8x128xf32>
    %c0_12 = arith.constant 0 : index
    %c0_13 = arith.constant 0 : index
    %18 = vector.load %arg6[%c0_12, %c0_13] : memref<8x128xf32, #tpu.memory_space<vmem>>, vector<8x128xf32>
    tpu.vector_store %arg6[%c0_12, %c0_13], %17 {strides = array<i32>} : memref<8x128xf32, #tpu.memory_space<vmem>>, vector<8x128xf32>,
    return
  }
  func.func @transform_0(%arg0: i32) -> (i32, i32) {
    %c0_i32 = arith.constant 0 : i32
    %c0_i32_0 = arith.constant 0 : i32
    return %arg0, %c0_i32 : i32, i32
  }
  func.func @transform_1(%arg0: i32) -> (i32, i32) {
    %c0_i32 = arith.constant 0 : i32
    %c0_i32_0 = arith.constant 0 : i32
    %c0_i32_1 = arith.constant 0 : i32
    return %c0_i32, %c0_i32_0 : i32, i32
  }
  func.func @transform_2(%arg0: i32) -> (i32, i32) {
    %c0_i32 = arith.constant 0 : i32
    %c0_i32_0 = arith.constant 0 : i32
    %c0_i32_1 = arith.constant 0 : i32
    return %c0_i32, %c0_i32_0 : i32, i32
  }
  func.func @transform_3(%arg0: i32) -> (i32, i32) {
    %c0_i32 = arith.constant 0 : i32
    %c0_i32_0 = arith.constant 0 : i32
    %c0_i32_1 = arith.constant 0 : i32
    return %c0_i32, %c0_i32_0 : i32, i32
  }
  func.func @transform_4(%arg0: i32) -> (i32, i32) {
    %c0_i32 = arith.constant 0 : i32
    %c0_i32_0 = arith.constant 0 : i32
    %c0_i32_1 = arith.constant 0 : i32
    return %c0_i32, %c0_i32_0 : i32, i32
  }
  func.func @transform_5(%arg0: i32) -> (i32, i32) {
    %c0_i32 = arith.constant 0 : i32
    %c0_i32_0 = arith.constant 0 : i32
    return %arg0, %c0_i32 : i32, i32
  }
}

</mosaic_0001>

<llo_original>
// kernel: _mlp_forward.1
$region0: #{_mlp_forward.1}
  #allocation0 [shape = 'u32[]', space=smem, size = 0x4, offset = 0x4, fixed_abs, tag = 'smem constant byte address 0x4 - core index']
  #allocation1 [shape = 'u32[72,128]{1,0:T(1,128)}', space=vmem, size = 0x9000, scoped, tag = 'internal scratch']
  %s0 = inlined_call_operand.vmem [shape: f32[8,128], index: 0, kind: input, shape index: {}]
  %s1 = inlined_call_operand.hbm [shape: f32[128,128], index: 1, kind: input, shape index: {}]
  %s2 = inlined_call_operand.vmem [shape: f32[1,128], index: 2, kind: input, shape index: {}]
  %s3 = inlined_call_operand.hbm [shape: f32[128,128], index: 3, kind: input, shape index: {}]
  %s4 = inlined_call_operand.vmem [shape: f32[1,128], index: 4, kind: input, shape index: {}]
  %s5 = inlined_call_operand.hbm [shape: f32[8,128], index: 5, kind: output, shape index: {}]
  %s6 = sld [smem:[#allocation0]]
  $region38: #{_mlp_forward.1} parent=0
    _
  %s8 = ssub.s32 1, %s6
  %s9 = scalar_select 0, %s8, %s6
  $region1: #{_mlp_forward.1} parent=0
    #allocation2 [shape = 'u8[65536]{0}', space=vmem, size = 0x10000, scoped, tag = 'input window, operand 1, single buffered']
    #allocation3 [shape = 's32[1]{0}', space=sflag, size = 0x4, scoped, tag = 'scoped memory for _mlp_forward.1']
    #allocation4 [shape = 's32[1]{0}', space=sflag, size = 0x4, scoped, tag = 'scoped memory for _mlp_forward.1']
    #allocation5 [shape = 'u8[65536]{0}', space=vmem, size = 0x10000, scoped, tag = 'input window, operand 3, single buffered']
    #allocation6 [shape = 's32[1]{0}', space=sflag, size = 0x4, scoped, tag = 'scoped memory for _mlp_forward.1']
    #allocation7 [shape = 'u8[4096]{0}', space=vmem, size = 0x1000, scoped, tag = 'output window, operand 0, single buffered']
    %10 = vsyncpa [#allocation3], 0
    %11 = vsyncpa [#allocation6], 0
    %12 = vsyncpa [#allocation4], 0
    // Predicated region
    $region2: #{_mlp_forward.1} parent=1 // pred_check
      _
    $region3: #{_mlp_forward.1} parent=1 // pred_check_branch
      %14 = sbr.rel (0) target = $region5
    $region4: #{_mlp_forward.1} parent=1 // pred_region
      _
    $region5: #{_mlp_forward.1} parent=1 // pred_fallthru
      _
    // Predicated region
    $region6: #{_mlp_forward.1} parent=1 // pred_check
      _
    $region7: #{_mlp_forward.1} parent=1 // pred_check_branch
      %16 = sbr.rel (0) target = $region9
    $region8: #{_mlp_forward.1} parent=1 // pred_region
      %18 = vsyncadd [#allocation3], 0
      %s19 = sshll.u32 %s1, 4
      %s20 = int_to_ptr.hbm [resolvable:$true] %s19
      %s21 = sshll.u32 [#allocation2], 4
      %s22 = int_to_ptr.vmem [resolvable:$true] %s21
      %27 = dma.hbm_to_vmem [thread:$0]  %s20, 2048, %s22, [#allocation3], 128, 128, 8
    $region9: #{_mlp_forward.1} parent=1 // pred_fallthru
      _
    // Predicated region
    $region10: #{_mlp_forward.1} parent=1 // pred_check
      _
    $region11: #{_mlp_forward.1} parent=1 // pred_check_branch
      %29 = sbr.rel (0) target = $region13
    $region12: #{_mlp_forward.1} parent=1 // pred_region
      _
    $region13: #{_mlp_forward.1} parent=1 // pred_fallthru
      _
    // Predicated region
    $region14: #{_mlp_forward.1} parent=1 // pred_check
      _
    $region15: #{_mlp_forward.1} parent=1 // pred_check_branch
      %31 = sbr.rel (0) target = $region17
    $region16: #{_mlp_forward.1} parent=1 // pred_region
      %33 = vsyncadd [#allocation6], 0
      %s34 = sshll.u32 %s3, 4
      %s35 = int_to_ptr.hbm [resolvable:$true] %s34
      %s36 = sshll.u32 [#allocation5], 4
      %s37 = int_to_ptr.vmem [resolvable:$true] %s36
      %42 = dma.hbm_to_vmem [thread:$0]  %s35, 2048, %s37, [#allocation6], 128, 128, 8
    $region17: #{_mlp_forward.1} parent=1 // pred_fallthru
      _
    // Predicated region
    $region18: #{_mlp_forward.1} parent=1 // pred_check
      _
    $region19: #{_mlp_forward.1} parent=1 // pred_check_branch
      %44 = sbr.rel (0) target = $region21
    $region20: #{_mlp_forward.1} parent=1 // pred_region
      _
    $region21: #{_mlp_forward.1} parent=1 // pred_fallthru
      _
    // Predicated region
    $region22: #{_mlp_forward.1} parent=1 // pred_check
      _
    $region23: #{_mlp_forward.1} parent=1 // pred_check_branch
      %46 = sbr.rel (0) target = $region25
    $region24: #{_mlp_forward.1} parent=1 // pred_region
      %48 = dma.done [#allocation3], 2048
    $region25: #{_mlp_forward.1} parent=1 // pred_fallthru
      _
    // Predicated region
    $region26: #{_mlp_forward.1} parent=1 // pred_check
      _
    $region27: #{_mlp_forward.1} parent=1 // pred_check_branch
      %50 = sbr.rel (0) target = $region29
    $region28: #{_mlp_forward.1} parent=1 // pred_region
      %52 = dma.done [#allocation6], 2048
    $region29: #{_mlp_forward.1} parent=1 // pred_fallthru
      _
    %v53 = vld [vmem:[%s0] sm:$0xff]
    %v54 = vld [vmem:[#allocation2] sm:$0xff]
    %v55 = vld [vmem:[#allocation2 + $0x8] sm:$0xff]
    %v56 = vld [vmem:[#allocation2 + $0x10] sm:$0xff]
    %v57 = vld [vmem:[#allocation2 + $0x18] sm:$0xff]
    %v58 = vld [vmem:[#allocation2 + $0x20] sm:$0xff]
    %v59 = vld [vmem:[#allocation2 + $0x28] sm:$0xff]
    %v60 = vld [vmem:[#allocation2 + $0x30] sm:$0xff]
    %v61 = vld [vmem:[#allocation2 + $0x38] sm:$0xff]
    %v62 = vld [vmem:[#allocation2 + $0x40] sm:$0xff]
    %v63 = vld [vmem:[#allocation2 + $0x48] sm:$0xff]
    %v64 = vld [vmem:[#allocation2 + $0x50] sm:$0xff]
    %v65 = vld [vmem:[#allocation2 + $0x58] sm:$0xff]
    %v66 = vld [vmem:[#allocation2 + $0x60] sm:$0xff]
    %v67 = vld [vmem:[#allocation2 + $0x68] sm:$0xff]
    %v68 = vld [vmem:[#allocation2 + $0x70] sm:$0xff]
    %v69 = vld [vmem:[#allocation2 + $0x78] sm:$0xff]
    %v70 = vld [vmem:[%s2] sm:$0x1]
    %v72 = vperm.slane %v70, 0
    %74 = vmatpush.msra.mxu0 %v69
    %75 = vmatpush.msra.mxu0 %v68
    %76 = vmatpush.msra.mxu0 %v67
    %77 = vmatpush.msra.mxu0 %v66
    %78 = vmatpush.msra.mxu0 %v65
    %79 = vmatpush.msra.mxu0 %v64
    %80 = vmatpush.msra.mxu0 %v63
    %81 = vmatpush.msra.mxu0 %v62
    %82 = vmatpush.msra.mxu0 %v61
    %83 = vmatpush.msra.mxu0 %v60
    %84 = vmatpush.msra.mxu0 %v59
    %85 = vmatpush.msra.mxu0 %v58
    %86 = vmatpush.msra.mxu0 %v57
    %87 = vmatpush.msra.mxu0 %v56
    %88 = vmatpush.msra.mxu0 %v55
    %89 = vmatpush.msra.mxu0 %v54
    %90 = vmatmul.f32.gmra.mxu0 %v53
    %v91 = vpop.f32.mrf.mxu0
    %v92 = vadd.f32 %v72, %v91
    %93 = vdwg.mxu0
    %v94 = vmax.f32 %v92, 0.0
    %v95 = vld [vmem:[#allocation5] sm:$0xff]
    %v96 = vld [vmem:[#allocation5 + $0x8] sm:$0xff]
    %v97 = vld [vmem:[#allocation5 + $0x10] sm:$0xff]
    %v98 = vld [vmem:[#allocation5 + $0x18] sm:$0xff]
    %v99 = vld [vmem:[#allocation5 + $0x20] sm:$0xff]
    %v100 = vld [vmem:[#allocation5 + $0x28] sm:$0xff]
    %v101 = vld [vmem:[#allocation5 + $0x30] sm:$0xff]
    %v102 = vld [vmem:[#allocation5 + $0x38] sm:$0xff]
    %v103 = vld [vmem:[#allocation5 + $0x40] sm:$0xff]
    %v104 = vld [vmem:[#allocation5 + $0x48] sm:$0xff]
    %v105 = vld [vmem:[#allocation5 + $0x50] sm:$0xff]
    %v106 = vld [vmem:[#allocation5 + $0x58] sm:$0xff]
    %v107 = vld [vmem:[#allocation5 + $0x60] sm:$0xff]
    %v108 = vld [vmem:[#allocation5 + $0x68] sm:$0xff]
    %v109 = vld [vmem:[#allocation5 + $0x70] sm:$0xff]
    %v110 = vld [vmem:[#allocation5 + $0x78] sm:$0xff]
    %v111 = vld [vmem:[%s4] sm:$0x1]
    %v113 = vperm.slane %v111, 0
    %115 = vmatpush.msra.mxu0 %v110
    %116 = vmatpush.msra.mxu0 %v109
    %117 = vmatpush.msra.mxu0 %v108
    %118 = vmatpush.msra.mxu0 %v107
    %119 = vmatpush.msra.mxu0 %v106
    %120 = vmatpush.msra.mxu0 %v105
    %121 = vmatpush.msra.mxu0 %v104
    %122 = vmatpush.msra.mxu0 %v103
    %123 = vmatpush.msra.mxu0 %v102
    %124 = vmatpush.msra.mxu0 %v101
    %125 = vmatpush.msra.mxu0 %v100
    %126 = vmatpush.msra.mxu0 %v99
    %127 = vmatpush.msra.mxu0 %v98
    %128 = vmatpush.msra.mxu0 %v97
    %129 = vmatpush.msra.mxu0 %v96
    %130 = vmatpush.msra.mxu0 %v95
    %131 = vmatmul.f32.gmra.mxu0 %v94
    %v132 = vpop.f32.mrf.mxu0
    %v133 = vadd.f32 %v113, %v132
    %134 = vdwg.mxu0
    %v135 = vxor.u32 %v133, 2147483648
    %v136 = vmul.f32 %v135, 1.442695
    %v137 = vpow.pop %v136
    %v138 = vadd.f32 %v137, 1.0
    %v139 = vrcp.pop %v138
    %v140 = vmul.f32 %v138, %v139
    %v141 = vsub.f32 1.0, %v140
    %v142 = vmul.f32 %v139, %v141
    %v143 = vadd.f32 %v139, %v142
    %vm144 = vweird.f32 %v138
    %vm145 = vweird.f32 %v139
    %vm146 = vmor %vm144, %vm145
    %v147 = vsel %vm146, %v139, %v143
    %v148 = vand.u32 2147483647, %v138
    %vm149 = vcmp.eq.f32.partialorder %v148, 8.507059e+37
    %v150 = vand.u32 %v138, 2147483648
    %v151 = vor.u32 1.1754944e-38, %v150
    %v152 = vsel %vm149, %v151, %v147
    %v153 = vmul.f32 1.0, %v152
    %154 = vst [vmem:[#allocation7] sm:$0xff] %v153
    // Predicated region
    $region30: #{_mlp_forward.1} parent=1 // pred_check
      _
    $region31: #{_mlp_forward.1} parent=1 // pred_check_branch
      %156 = sbr.rel (0) target = $region33
    $region32: #{_mlp_forward.1} parent=1 // pred_region
      %158 = vsyncadd [#allocation4], 0
      %s160 = sshll.u32 [#allocation7], 4
      %s161 = int_to_ptr.vmem [resolvable:$true] %s160
      %s162 = sshll.u32 %s5, 4
      %s163 = int_to_ptr.hbm [resolvable:$true] %s162
      %165 = dma.vmem_to_hbm [thread:$0]  %s161, 128, %s163, [#allocation4]
    $region33: #{_mlp_forward.1} parent=1 // pred_fallthru
      _
    // Predicated region
    $region34: #{_mlp_forward.1} parent=1 // pred_check
      _
    $region35: #{_mlp_forward.1} parent=1 // pred_check_branch
      %167 = sbr.rel (0) target = $region37
    $region36: #{_mlp_forward.1} parent=1 // pred_region
      %169 = dma.done [#allocation4], 128
    $region37: #{_mlp_forward.1} parent=1 // pred_fallthru
      _
    %170 = vsyncpa [#allocation3], 1
    %171 = vsyncpa [#allocation6], 1
    %172 = vsyncpa [#allocation4], 1

</llo_original>
